<compile_context>
chip_gen: v7x
topology: tpu7x:2x2x1
jax: 0.10.0
libtpu: 0.0.40
codegen_flags: <defaults>
</compile_context>

<pallas_src>
import jax
import jax.numpy as jnp
from jax.experimental import pallas as pl
from jax.experimental.pallas import tpu as pltpu


def _flatsim_kernel(x_ref, y_ref, mask_ref, w_ref, bias_ref, o_ref):
    # x_ref:    (TB, TL, H)  native dtype (f32 or bf16)
    # y_ref:    (TB, H)      native dtype
    # mask_ref: (TB, TL)     int8  (nonzero == padded)
    # w_ref:    (4, H)       f32   rows: [w_x, w_y, w_xy, w_abs]
    # bias_ref: (1,)         f32   (SMEM scalar)
    # o_ref:    (TB, TL)     f32
    x = x_ref[...].astype(jnp.float32)           # cast per-tile; accumulate f32
    y = y_ref[...].astype(jnp.float32)           # (TB, H)

    w_x = w_ref[0:1, :]                          # (1, H)
    w_y = w_ref[1:2, :]
    w_xy = w_ref[2:3, :]
    w_abs = w_ref[3:4, :]

    # Fold:  x@w_x + (x*y)@w_xy  ==  x @ (w_x + y*w_xy)   (per-batch weight).
    wx = w_x + y * w_xy                          # (TB, H)
    axy = jnp.abs(x - y[:, None, :])             # (TB, TL, H)

    # Single fused contraction over H (VPU mul/add + one lane reduce; no MXU
    # matvec with degenerate N, no transpose of the x tile).
    s = jnp.sum(x * wx[:, None, :] + axy * w_abs[:, None, :], axis=-1)  # (TB, TL)

    # Per-batch constant:  y @ w_y + bias  (broadcast over L).
    s = s + jnp.sum(y * w_y, axis=-1, keepdims=True) + bias_ref[0]

    o_ref[...] = jnp.where(mask_ref[...] != 0, -jnp.inf, s).astype(o_ref.dtype)


def _choose_tiles(B, L, H):
    """Pick (TB, TL) respecting the (8,128)/full-dim block rules and VMEM."""
    # Batch tile: full batch when small, else 8 (sublane-full output rows and
    # >= 2 grid steps on the batch axis for v7x's two TensorCores).
    TB = B if B <= 8 else 8
    # L tile: full L when small; otherwise a multiple of 128 (lane-dense,
    # unmasked output stores) sized so one f32 x tile stays ~<= 2 MiB, keeping
    # double-buffered inputs + intermediates well under the 32 MiB scoped-VMEM
    # default (v7x only has 64 MiB physical VMEM; v5e/v6e have 128 MiB).
    lane_h = -(-H // 128) * 128                  # VMEM pads the lane dim to 128
    budget = 2 * 1024 * 1024                     # bytes, f32 working copy of x
    if TB * L * lane_h * 4 <= budget:
        TL = L
    else:
        TL = max(128, (budget // (TB * lane_h * 4)) // 128 * 128)
        TL = min(TL, L)
    return TB, TL


@jax.jit
def flat_sim_v2(x, y, x_mask, weight, bias):
    """JAX/Pallas equivalent of FlatSimV2.forward (inference defaults).

    x:      (B, L, H)  any float dtype (kept native; cast in-kernel)
    y:      (B, H)
    x_mask: (B, L) bool (True = padded position -> score set to -inf)
    weight: (1, 4H)  PyTorch nn.Linear(4H, 1).weight layout
    bias:   (1,)     nn.Linear bias
    returns (B, L) f32 scores
    """
    B, L, H = x.shape
    assert y.shape == (B, H)
    assert x_mask.shape == (B, L)
    assert weight.shape == (1, 4 * H)

    mask = x_mask.astype(jnp.int8)                    # no int32 widening
    w4 = weight.astype(jnp.float32).reshape(4, H)     # [w_x; w_y; w_xy; w_abs]
    b1 = bias.astype(jnp.float32).reshape(1)

    TB, TL = _choose_tiles(B, L, H)
    grid = (pl.cdiv(B, TB), pl.cdiv(L, TL))

    # Fused cost: contraction over H (mul+add for x and |x-y| terms) + sub/abs.
    flops = 6 * B * L * H
    bytes_accessed = (B * L * H * x.dtype.itemsize    # x (native dtype)
                      + B * H * y.dtype.itemsize      # y (native dtype)
                      + B * L * 1                     # int8 mask
                      + 4 * H * 4 + 4                 # weight rows + bias
                      + B * L * 4)                    # f32 output

    out = pl.pallas_call(
        _flatsim_kernel,
        out_shape=jax.ShapeDtypeStruct((B, L), jnp.float32),
        grid_spec=pltpu.PrefetchScalarGridSpec(
            num_scalar_prefetch=0,
            grid=grid,
            in_specs=[
                pl.BlockSpec((TB, TL, H), lambda b, l: (b, l, 0)),   # x
                pl.BlockSpec((TB, H), lambda b, l: (b, 0)),          # y
                pl.BlockSpec((TB, TL), lambda b, l: (b, l)),         # mask int8
                pl.BlockSpec((4, H), lambda b, l: (0, 0)),           # weight rows
                pl.BlockSpec(memory_space=pltpu.MemorySpace.SMEM),   # bias scalar
            ],
            out_specs=pl.BlockSpec((TB, TL), lambda b, l: (b, l)),
        ),
        compiler_params=pltpu.CompilerParams(
            dimension_semantics=("parallel", "parallel")),
        cost_estimate=pl.CostEstimate(
            flops=flops, transcendentals=0, bytes_accessed=bytes_accessed),
    )(x, y, mask, w4, b1)

    return out


def _reference(x, y, x_mask, weight, bias):
    """Pure-JAX mirror of the PyTorch forward (inference defaults)."""
    B, L, H = x.shape
    xf = x.astype(jnp.float32)
    yf = y.astype(jnp.float32)
    ye = jnp.broadcast_to(yf[:, None, :], (B, L, H))
    flat = jnp.concatenate([xf, ye, xf * ye, jnp.abs(xf - ye)], axis=2)
    flat = flat.reshape(B * L, 4 * H)
    scores = (flat @ weight.astype(jnp.float32).T
              + bias.astype(jnp.float32)).reshape(B, L)
    return jnp.where(x_mask, -jnp.inf, scores)


if __name__ == "__main__":
    # Small shapes consistent with the module: batch=2, len=8, hidden=32.
    B, L, H = 2, 8, 32
    key0 = jax.random.PRNGKey(0)
    kx, ky, kw, kb = jax.random.split(key0, 4)
    x = jax.random.normal(kx, (B, L, H), dtype=jnp.float32)
    y = jax.random.normal(ky, (B, H), dtype=jnp.float32)
    weight = jax.random.normal(kw, (1, 4 * H), dtype=jnp.float32) * 0.1
    bias = jax.random.normal(kb, (1,), dtype=jnp.float32) * 0.1
    # x_mask: True where the position is padded (last 3 positions of batch 1).
    x_mask = jnp.zeros((B, L), dtype=bool).at[1, -3:].set(True)

    # f32 inputs: tight tolerance vs the pure-JAX reference.
    out = jax.block_until_ready(flat_sim_v2(x, y, x_mask, weight, bias))
    ref = _reference(x, y, x_mask, weight, bias)
    assert out.shape == (B, L)
    assert bool(jnp.all(jnp.isneginf(out) == jnp.isneginf(ref))), "mask mismatch"
    finite = ~jnp.isneginf(ref)
    assert jnp.allclose(jnp.where(finite, out, 0.0),
                        jnp.where(finite, ref, 0.0),
                        atol=1e-5, rtol=1e-5), "mismatch vs reference (f32)"

    # bf16 inputs: native-dtype pass-through (no wrapper upcast), f32 accum.
    x_bf = x.astype(jnp.bfloat16)
    y_bf = y.astype(jnp.bfloat16)
    out_bf = jax.block_until_ready(flat_sim_v2(x_bf, y_bf, x_mask, weight, bias))
    ref_bf = _reference(x_bf, y_bf, x_mask, weight, bias)
    assert bool(jnp.all(jnp.isneginf(out_bf) == jnp.isneginf(ref_bf)))
    finite_bf = ~jnp.isneginf(ref_bf)
    assert jnp.allclose(jnp.where(finite_bf, out_bf, 0.0),
                        jnp.where(finite_bf, ref_bf, 0.0),
                        atol=2e-2, rtol=2e-2), "mismatch vs reference (bf16)"

    print("KERNEL_OK")
</pallas_src>

<mosaic_0001>
module attributes {stable_mosaic.version = 11 : i64} {
  func.func @_flatsim_kernel(%arg0: i32, %arg1: i32, %arg2: memref<2x8x32xf32, #tpu.memory_space<vmem>>, %arg3: memref<2x32xf32, #tpu.memory_space<vmem>>, %arg4: memref<2x8xi8, #tpu.memory_space<vmem>>, %arg5: memref<4x32xf32, #tpu.memory_space<vmem>>, %arg6: memref<1xf32, #tpu.memory_space<smem>>, %arg7: memref<2x8xf32, #tpu.memory_space<vmem>>) attributes {dimension_semantics = [#tpu.dimension_semantics<parallel>, #tpu.dimension_semantics<parallel>], iteration_bounds = array<i64: 1, 1>, scalar_prefetch = 0 : i64, scratch_operands = 0 : i64, tpu.core_type = #tpu.core_type<tc>, window_params = [{transform_indices = @transform_0, window_bounds = array<i64: 2, 8, 32>}, {transform_indices = @transform_1, window_bounds = array<i64: 2, 32>}, {transform_indices = @transform_2, window_bounds = array<i64: 2, 8>}, {pipeline_mode = #tpu.pipeline_mode<synchronous>, transform_indices = @transform_3, window_bounds = array<i64: 4, 32>}, {transform_indices = @transform_4, window_bounds = array<i64: 1>}, {transform_indices = @transform_5, window_bounds = array<i64: 2, 8>}]} {
    %c0 = arith.constant 0 : index
    %c0_0 = arith.constant 0 : index
    %c0_1 = arith.constant 0 : index
    %0 = vector.load %arg2[%c0, %c0_0, %c0_1] : memref<2x8x32xf32, #tpu.memory_space<vmem>>, vector<2x8x32xf32>
    %c0_2 = arith.constant 0 : index
    %c0_3 = arith.constant 0 : index
    %1 = vector.load %arg3[%c0_2, %c0_3] : memref<2x32xf32, #tpu.memory_space<vmem>>, vector<2x32xf32>
    %c0_4 = arith.constant 0 : index
    %c0_5 = arith.constant 0 : index
    %2 = vector.load %arg5[%c0_4, %c0_5] : memref<4x32xf32, #tpu.memory_space<vmem>>, vector<1x32xf32>
    %c1 = arith.constant 1 : index
    %c0_6 = arith.constant 0 : index
    %3 = vector.load %arg5[%c1, %c0_6] : memref<4x32xf32, #tpu.memory_space<vmem>>, vector<1x32xf32>
    %c2 = arith.constant 2 : index
    %c0_7 = arith.constant 0 : index
    %4 = vector.load %arg5[%c2, %c0_7] : memref<4x32xf32, #tpu.memory_space<vmem>>, vector<1x32xf32>
    %c3 = arith.constant 3 : index
    %c0_8 = arith.constant 0 : index
    %5 = vector.load %arg5[%c3, %c0_8] : memref<4x32xf32, #tpu.memory_space<vmem>>, vector<1x32xf32>
    %6 = vector.broadcast %4 : vector<1x32xf32> to vector<2x32xf32>
    %7 = arith.mulf %1, %6 : vector<2x32xf32>
    %8 = vector.broadcast %2 : vector<1x32xf32> to vector<2x32xf32>
    %9 = arith.addf %8, %7 : vector<2x32xf32>
    %10 = vector.shape_cast %1 : vector<2x32xf32> to vector<2x1x32xf32>
    %11 = vector.broadcast %10 : vector<2x1x32xf32> to vector<2x8x32xf32>
    %12 = arith.subf %0, %11 : vector<2x8x32xf32>
    %13 = math.absf %12 : vector<2x8x32xf32>
    %14 = vector.shape_cast %9 : vector<2x32xf32> to vector<2x1x32xf32>
    %15 = vector.broadcast %14 : vector<2x1x32xf32> to vector<2x8x32xf32>
    %16 = arith.mulf %0, %15 : vector<2x8x32xf32>
    %17 = vector.shape_cast %5 : vector<1x32xf32> to vector<1x1x32xf32>
    %18 = vector.broadcast %17 : vector<1x1x32xf32> to vector<2x8x32xf32>
    %19 = arith.mulf %13, %18 : vector<2x8x32xf32>
    %20 = arith.addf %16, %19 : vector<2x8x32xf32>
    %cst = arith.constant dense<0.000000e+00> : vector<2x8xf32>
    %21 = vector.multi_reduction <add>, %20, %cst [2] : vector<2x8x32xf32> to vector<2x8xf32>
    %22 = vector.broadcast %3 : vector<1x32xf32> to vector<2x32xf32>
    %23 = arith.mulf %1, %22 : vector<2x32xf32>
    %cst_9 = arith.constant dense<0.000000e+00> : vector<2xf32>
    %24 = vector.multi_reduction <add>, %23, %cst_9 [1] : vector<2x32xf32> to vector<2xf32>
    %25 = vector.shape_cast %24 : vector<2xf32> to vector<2x1xf32>
    %26 = vector.broadcast %25 : vector<2x1xf32> to vector<2x8xf32>
    %27 = arith.addf %21, %26 : vector<2x8xf32>
    %c0_10 = arith.constant 0 : index
    %28 = memref.load %arg6[%c0_10] : memref<1xf32, #tpu.memory_space<smem>>
    %29 = vector.broadcast %28 : f32 to vector<2x8xf32>
    %30 = arith.addf %27, %29 : vector<2x8xf32>
    %c0_11 = arith.constant 0 : index
    %c0_12 = arith.constant 0 : index
    %31 = vector.load %arg4[%c0_11, %c0_12] : memref<2x8xi8, #tpu.memory_space<vmem>>, vector<2x8xi8>
    %c0_i8 = arith.constant 0 : i8
    %32 = vector.broadcast %c0_i8 : i8 to vector<2x8xi8>
    %33 = arith.cmpi ne, %31, %32 : vector<2x8xi8>
    %cst_13 = arith.constant 0xFF800000 : f32
    %34 = vector.broadcast %cst_13 : f32 to vector<2x8xf32>
    %35 = arith.select %33, %34, %30 : vector<2x8xi1>, vector<2x8xf32>
    %c0_14 = arith.constant 0 : index
    %c0_15 = arith.constant 0 : index
    %36 = vector.load %arg7[%c0_14, %c0_15] : memref<2x8xf32, #tpu.memory_space<vmem>>, vector<2x8xf32>
    tpu.vector_store %arg7[%c0_14, %c0_15], %35 {strides = array<i32>} : memref<2x8xf32, #tpu.memory_space<vmem>>, vector<2x8xf32>,
    return
  }
  func.func @transform_0(%arg0: i32, %arg1: i32) -> (i32, i32, i32) {
    %c0_i32 = arith.constant 0 : i32
    %c0_i32_0 = arith.constant 0 : i32
    return %arg0, %arg1, %c0_i32 : i32, i32, i32
  }
  func.func @transform_1(%arg0: i32, %arg1: i32) -> (i32, i32) {
    %c0_i32 = arith.constant 0 : i32
    %c0_i32_0 = arith.constant 0 : i32
    return %arg0, %c0_i32 : i32, i32
  }
  func.func @transform_2(%arg0: i32, %arg1: i32) -> (i32, i32) {
    %c0_i32 = arith.constant 0 : i32
    return %arg0, %arg1 : i32, i32
  }
  func.func @transform_3(%arg0: i32, %arg1: i32) -> (i32, i32) {
    %c0_i32 = arith.constant 0 : i32
    %c0_i32_0 = arith.constant 0 : i32
    %c0_i32_1 = arith.constant 0 : i32
    return %c0_i32, %c0_i32_0 : i32, i32
  }
  func.func @transform_4(%arg0: i32, %arg1: i32) -> i32 {
    %c0_i32 = arith.constant 0 : i32
    %c0_i32_0 = arith.constant 0 : i32
    return %c0_i32 : i32
  }
  func.func @transform_5(%arg0: i32, %arg1: i32) -> (i32, i32) {
    %c0_i32 = arith.constant 0 : i32
    return %arg0, %arg1 : i32, i32
  }
}

</mosaic_0001>

<llo_original>
// kernel: flat_sim_v2.1
$region0: #{flat_sim_v2.1}
  #allocation0 [shape = 'u32[]', space=smem, size = 0x4, offset = 0x4, fixed_abs, tag = 'smem constant byte address 0x4 - core index']
  #allocation1 [shape = 'u32[144,128]{1,0:T(1,128)}', space=vmem, size = 0x12000, scoped, tag = 'internal scratch']
  #allocation2 [shape = 'f32[1]{0:T(128)S(6)}', space=smem, size = 0x200, scoped, tag = 'scoped memory for flat_sim_v2.1']
  %s0 = inlined_call_operand.vmem [shape: f32[2,8,32], index: 0, kind: input, shape index: {}]
  %s1 = inlined_call_operand.vmem [shape: f32[2,32], index: 1, kind: input, shape index: {}]
  %s2 = inlined_call_operand.vmem [shape: s8[2,8], index: 2, kind: input, shape index: {}]
  %s3 = inlined_call_operand.vmem [shape: f32[4,32], index: 3, kind: input, shape index: {}]
  %s4 = inlined_call_operand.<no memory space> [shape: f32[1], index: 4, kind: input, shape index: {}]
  %s5 = inlined_call_operand.hbm [shape: f32[2,8], index: 5, kind: output, shape index: {}]
  %s6 = sld [smem:[#allocation0]]
  $region30: #{flat_sim_v2.1} parent=0
    _
  %s8 = ssub.s32 1, %s6
  %s9 = scalar_select 0, %s8, %s6
  %10 = sst [smem:[#allocation2]] %s4
  $region1: #{flat_sim_v2.1} parent=0
    #allocation3 [shape = 'u8[1024]{0}', space=vmem, size = 0x400, scoped, tag = 'output window, operand 0, single buffered']
    #allocation4 [shape = 's32[1]{0}', space=sflag, size = 0x4, scoped, tag = 'scoped memory for flat_sim_v2.1']
    %11 = vsyncpa [#allocation4], 0
    // Predicated region
    $region2: #{flat_sim_v2.1} parent=1 // pred_check
      _
    $region3: #{flat_sim_v2.1} parent=1 // pred_check_branch
      %13 = sbr.rel (0) target = $region5
    $region4: #{flat_sim_v2.1} parent=1 // pred_region
      _
    $region5: #{flat_sim_v2.1} parent=1 // pred_fallthru
      _
    // Predicated region
    $region6: #{flat_sim_v2.1} parent=1 // pred_check
      _
    $region7: #{flat_sim_v2.1} parent=1 // pred_check_branch
      %15 = sbr.rel (0) target = $region9
    $region8: #{flat_sim_v2.1} parent=1 // pred_region
      _
    $region9: #{flat_sim_v2.1} parent=1 // pred_fallthru
      _
    // Predicated region
    $region10: #{flat_sim_v2.1} parent=1 // pred_check
      _
    $region11: #{flat_sim_v2.1} parent=1 // pred_check_branch
      %17 = sbr.rel (0) target = $region13
    $region12: #{flat_sim_v2.1} parent=1 // pred_region
      _
    $region13: #{flat_sim_v2.1} parent=1 // pred_fallthru
      _
    // Predicated region
    $region14: #{flat_sim_v2.1} parent=1 // pred_check
      _
    $region15: #{flat_sim_v2.1} parent=1 // pred_check_branch
      %19 = sbr.rel (0) target = $region17
    $region16: #{flat_sim_v2.1} parent=1 // pred_region
      _
    $region17: #{flat_sim_v2.1} parent=1 // pred_fallthru
      _
    // Predicated region
    $region18: #{flat_sim_v2.1} parent=1 // pred_check
      _
    $region19: #{flat_sim_v2.1} parent=1 // pred_check_branch
      %21 = sbr.rel (0) target = $region21
    $region20: #{flat_sim_v2.1} parent=1 // pred_region
      _
    $region21: #{flat_sim_v2.1} parent=1 // pred_fallthru
      _
    %v24 = vld [vmem:[%s0] sm:$0xff]
    %v25 = vld [vmem:[%s0 + $0x8] sm:$0xff]
    %v26 = vld [vmem:[%s1] sm:$0x3]
    %v27 = vld [vmem:[%s3] sm:$0x1]
    %v28 = vld [vmem:[%s3 + $0x1] sm:$0x1]
    %v29 = vld [vmem:[%s3 + $0x2] sm:$0x1]
    %v30 = vld [vmem:[%s3 + $0x3] sm:$0x1]
    %v31 = vlaneseq
    %v32 = vshrl.u32 %v31, 7
    %v33 = vsub.s32 0, %v32
    %v34 = vrot.slane %v29, %v33
    %v35 = vmul.f32 %v26, %v34
    %v36 = vlaneseq
    %v37 = vshrl.u32 %v36, 7
    %v38 = vsub.s32 0, %v37
    %v39 = vrot.slane %v27, %v38
    %v40 = vadd.f32 %v39, %v35
    %v43 = vunpack.c.l.s4 1966171168
    %v44 = vunpack.c.0.s8 %v43
    %v45 = vlaneseq
    %v46 = vshrl.u32 %v45, 7
    %v47 = vsub.s32 %v44, %v46
    %v48 = vrot.slane %v26, %v47
    %v49 = vcombine.high %v48, %v48
    %v51 = vunpack.c.l.s4 1966171168
    %v52 = vunpack.c.0.s8 %v51
    %v53 = vlaneseq
    %v54 = vshrl.u32 %v53, 7
    %v55 = vsub.s32 %v52, %v54
    %v56 = vrot.slane %v48, %v55
    %v58 = vunpack.c.l.s4 1966171168
    %v59 = vunpack.c.0.s8 %v58
    %v60 = vlaneseq
    %v61 = vshrl.u32 %v60, 7
    %v62 = vsub.s32 %v59, %v61
    %v63 = vrot.slane %v49, %v62
    %v64 = vlaneseq
    %v65 = vshrl.u32 %v64, 7
    %v66 = vsub.s32 0, %v65
    %v67 = vrot.slane %v56, %v66
    %v68 = vlaneseq
    %v69 = vshrl.u32 %v68, 7
    %v70 = vsub.s32 0, %v69
    %v71 = vrot.slane %v63, %v70
    %v74 = vsub.f32 %v24, %v67
    %v75 = vsub.f32 %v25, %v71
    %v76 = vand.u32 2147483647, %v74
    %v77 = vand.u32 2147483647, %v75
    %v80 = vunpack.c.l.s4 1966171168
    %v81 = vunpack.c.0.s8 %v80
    %v82 = vlaneseq
    %v83 = vshrl.u32 %v82, 7
    %v84 = vsub.s32 %v81, %v83
    %v85 = vrot.slane %v40, %v84
    %v86 = vcombine.high %v85, %v85
    %v88 = vunpack.c.l.s4 1966171168
    %v89 = vunpack.c.0.s8 %v88
    %v90 = vlaneseq
    %v91 = vshrl.u32 %v90, 7
    %v92 = vsub.s32 %v89, %v91
    %v93 = vrot.slane %v85, %v92
    %v95 = vunpack.c.l.s4 1966171168
    %v96 = vunpack.c.0.s8 %v95
    %v97 = vlaneseq
    %v98 = vshrl.u32 %v97, 7
    %v99 = vsub.s32 %v96, %v98
    %v100 = vrot.slane %v86, %v99
    %v101 = vlaneseq
    %v102 = vshrl.u32 %v101, 7
    %v103 = vsub.s32 0, %v102
    %v104 = vrot.slane %v93, %v103
    %v105 = vlaneseq
    %v106 = vshrl.u32 %v105, 7
    %v107 = vsub.s32 0, %v106
    %v108 = vrot.slane %v100, %v107
    %v111 = vmul.f32 %v24, %v104
    %v112 = vmul.f32 %v25, %v108
    %v113 = vlaneseq
    %v114 = vshrl.u32 %v113, 7
    %v115 = vsub.s32 0, %v114
    %v116 = vrot.slane %v30, %v115
    %v117 = vmul.f32 %v76, %v116
    %v118 = vmul.f32 %v77, %v116
    %v119 = vadd.f32 %v111, %v117
    %v120 = vadd.f32 %v112, %v118
    %vm121 = vcmask 261120
    %v122 = vsel %vm121, %v119, 0.0
    %123 = vadd.xlane.f32.xlu0 %v122
    %v124 = vpop.xlane.xlu0 %123
    %v125 = vsel %vm121, %v120, 0.0
    %126 = vadd.xlane.f32.xlu0 %v125
    %v127 = vpop.xlane.xlu0 %126
    %v128 = vlaneseq
    %v129 = vshrl.u32 %v128, 7
    %v130 = vsub.s32 0, %v129
    %v131 = vrot.slane %v28, %v130
    %v132 = vmul.f32 %v26, %v131
    %vm133 = vcmask 254976
    %v134 = vsel %vm133, %v132, 0.0
    %135 = vadd.xlane.f32.xlu0 %v134
    %v136 = vpop.xlane.xlu0 %135
    %v138 = vlaneseq
    %v139 = vshrl.u32 %v138, 7
    %v140 = vsub.s32 0, %v139
    %v141 = vrot.slane %v136, %v140
    %v142 = vlaneseq
    %v143 = vshrl.u32 %v142, 7
    %v144 = vsub.s32 1, %v143
    %v145 = vrot.slane %v136, %v144
    %v148 = vadd.f32 %v124, %v141
    %v149 = vadd.f32 %v127, %v145
    %s150 = sld [smem:[#allocation2]]
    %v151 = vstv %s150
    %v152 = vadd.f32 %v148, %v151
    %v153 = vadd.f32 %v149, %v151
    %v154 = vld [vmem:[%s2] sm:$0x1]
    %vm155 = vnez %v154
    %v156 = vsel %vm155, 16843009, 0
    %v158 = vunpack.c.l.s4 1935823168
    %v159 = vunpack.c.0.s8 %v158
    %v160 = vlaneseq
    %v161 = vshrl.u32 %v160, 7
    %v162 = vsub.s32 %v159, %v161
    %v163 = vrot.slane %v156, %v162
    %v164 = vunpack.c.0.s8 %v163
    %v165 = vlaneseq
    %v166 = vshrl.u32 %v165, 7
    %v167 = vsub.s32 0, %v166
    %v168 = vrot.slane %v164, %v167
    %170 = vbcast.lane.b32.xlu0 %v168, 256
    %v171 = vpop.permute.xlu0 %170
    %v172 = vlaneseq
    %v173 = vshrl.u32 %v172, 7
    %v174 = vsub.s32 1, %v173
    %v175 = vrot.slane %v164, %v174
    %177 = vbcast.lane.b32.xlu0 %v175, 256
    %v178 = vpop.permute.xlu0 %177
    %v179 = vpack.c.b16 %v171, %v171
    %v180 = vpack.c.b8 %v179, %v179
    %v181 = vpack.c.b16 %v178, %v178
    %v182 = vpack.c.b8 %v181, %v181
    %v184 = vunpack.c.l.s4 1966171168
    %v185 = vunpack.c.0.s8 %v184
    %v186 = vlaneseq
    %v187 = vshrl.u32 %v186, 7
    %v188 = vsub.s32 %v185, %v187
    %v189 = vrot.slane %v180, %v188
    %v190 = vcombine.high %v189, %v189
    %v192 = vunpack.c.l.s4 1966171168
    %v193 = vunpack.c.0.s8 %v192
    %v194 = vlaneseq
    %v195 = vshrl.u32 %v194, 7
    %v196 = vsub.s32 %v193, %v195
    %v197 = vrot.slane %v182, %v196
    %v198 = vcombine.high %v197, %v197
    %vm199 = vnez %v189
    %vm200 = vnez %v190
    %vm201 = vnez %v197
    %vm202 = vnez %v198
    %v203 = vsel %vm199, 16843009, 0
    %v204 = vsel %vm200, 16843009, 0
    %v205 = vsel %vm201, 16843009, 0
    %v206 = vsel %vm202, 16843009, 0
    %v207 = vunpack.c.0.s8 %v203
    %v208 = vunpack.c.0.s8 %v204
    %v209 = vunpack.c.0.s8 %v205
    %v210 = vunpack.c.0.s8 %v206
    %vm211 = vcmp.ne.s32.totalorder %v207, 0
    %vm212 = vcmp.ne.s32.totalorder %v208, 0
    %vm213 = vcmp.ne.s32.totalorder %v209, 0
    %vm214 = vcmp.ne.s32.totalorder %v210, 0
    %v215 = vsel %vm211, 1, 0
    %v216 = vsel %vm212, 1, 0
    %v217 = vsel %vm213, 1, 0
    %v218 = vsel %vm214, 1, 0
    %v219 = vcombine.low %v215, %v216
    %v220 = vcombine.low %v217, %v218
    %vm221 = vcmp.ne.s32.totalorder %v219, 0
    %vm222 = vcmp.ne.s32.totalorder %v220, 0
    %v223 = vsel %vm221, -inf, %v152
    %v224 = vsel %vm222, -inf, %v153
    %227 = vset.pattern.permute.xlu0 0
    %228 = vperm.xlu0 %227, %v223
    %v229 = vpop.permute.xlu0 %228
    %230 = vset.pattern.permute.xlu0 0
    %231 = vperm.xlu0 %230, %v224
    %v232 = vpop.permute.xlu0 %231
    %v233 = vlaneseq
    %v234 = vand.u32 %v233, 127
    %v235 = vlaneseq
    %v236 = vshrl.u32 %v235, 7
    %v237 = vsub.s32 %v234, %v236
    %v238 = vrot.slane %v229, %v237
    %v239 = vlaneseq
    %v240 = vshrl.u32 %v239, 7
    %v241 = vsub.s32 %v234, %v240
    %v242 = vrot.slane %v232, %v241
    %vm243 = vcmask 1041409
    %v244 = vsel %vm243, %v242, %v238
    %vm246 = vcmask 58368
    %247 = vst.msk [vmem:[#allocation3] sm:$0x3] %vm246, %v244
    // Predicated region
    $region22: #{flat_sim_v2.1} parent=1 // pred_check
      _
    $region23: #{flat_sim_v2.1} parent=1 // pred_check_branch
      %249 = sbr.rel (0) target = $region25
    $region24: #{flat_sim_v2.1} parent=1 // pred_region
      %s251 = ssub.s32 32, 32
      %252 = vsyncadd [#allocation4], %s251
      %s254 = sshll.u32 [#allocation3], 4
      %s255 = int_to_ptr.vmem [resolvable:$true] %s254
      %257 = dma.vmem_to_hbm [thread:$0]  %s255, 32, %s5, [#allocation4]
    $region25: #{flat_sim_v2.1} parent=1 // pred_fallthru
      _
    // Predicated region
    $region26: #{flat_sim_v2.1} parent=1 // pred_check
      _
    $region27: #{flat_sim_v2.1} parent=1 // pred_check_branch
      %259 = sbr.rel (0) target = $region29
    $region28: #{flat_sim_v2.1} parent=1 // pred_region
      %260 = dma.done [#allocation4], 32
    $region29: #{flat_sim_v2.1} parent=1 // pred_fallthru
      _
    %261 = vsyncpa [#allocation4], 1

</llo_original>
